<compile_context>
chip_gen: v7x
topology: tpu7x:2x2x1
jax: 0.10.0
libtpu: 0.0.40
codegen_flags: <defaults>
</compile_context>

<pallas_src>
import functools

import jax
import jax.numpy as jnp
from jax.experimental import pallas as pl
from jax.experimental.pallas import tpu as pltpu

LANES = 128  # lane width of one vreg; all parameter column counts fit in it.


def _round_up(n, m):
    return ((n + m - 1) // m) * m


# ---------------------------------------------------------------------------
# Packed-parameter layout: every entry starts at a row offset that is a
# multiple of 8 (sublane aligned); all columns start at lane 0.
# ---------------------------------------------------------------------------
def make_layout(input_dim, hidden_dim, latent_dim):
    fused_cols = 2 * latent_dim + hidden_dim + 1   # [zw | lw1 | mw]
    entries = [
        ("ew1", input_dim, hidden_dim),
        ("ew2", hidden_dim, hidden_dim),
        ("zml_w", hidden_dim, fused_cols),
        ("lw2", hidden_dim, hidden_dim),
        ("lw3", hidden_dim, 1),
        ("dw1", latent_dim, hidden_dim),
        ("dw2", hidden_dim, input_dim),
        ("dw3", input_dim, input_dim),
        ("eb1", 1, hidden_dim),
        ("eb2", 1, hidden_dim),
        ("zml_b", 1, fused_cols),
        ("lb2", 1, hidden_dim),
        ("lb3", 1, 1),
        ("db1", 1, hidden_dim),
        ("db2", 1, input_dim),
        ("db3", 1, input_dim),
    ]
    layout = {}
    off = 0
    for name, rows, cols in entries:
        assert cols <= LANES
        layout[name] = (off, rows, cols)
        off += _round_up(rows, 8)
    return layout, off


def pack_params(params, input_dim, hidden_dim, latent_dim):
    """Pack all weights/biases into one (total_rows, 128) f32 slab (call once)."""
    layout, total_rows = make_layout(input_dim, hidden_dim, latent_dim)
    # Fused weight for the three matmuls fed by xwarp: [zw | lw1 | mw].
    fused_w = jnp.concatenate([params["zw"], params["lw1"], params["mw"]], axis=1)
    fused_b = jnp.concatenate([params["zb"], params["lb1"], params["mb"]], axis=1)
    items = dict(
        ew1=params["ew1"], ew2=params["ew2"], zml_w=fused_w,
        lw2=params["lw2"], lw3=params["lw3"],
        dw1=params["dw1"], dw2=params["dw2"], dw3=params["dw3"],
        eb1=params["eb1"], eb2=params["eb2"], zml_b=fused_b,
        lb2=params["lb2"], lb3=params["lb3"],
        db1=params["db1"], db2=params["db2"], db3=params["db3"],
    )
    slab = jnp.zeros((total_rows, LANES), jnp.float32)
    for name, arr in items.items():
        off, rows, cols = layout[name]
        slab = slab.at[off:off + rows, :cols].set(arr.astype(jnp.float32))
    return slab


# ---------------------------------------------------------------------------
# Kernel
# ---------------------------------------------------------------------------
def make_vae_kernel(layout, input_dim, hidden_dim, latent_dim):
    D, H, L = input_dim, hidden_dim, latent_dim
    f32 = jnp.float32

    def wslice(ref, name):
        off, rows, cols = layout[name]
        return ref[off:off + rows, :cols]   # static, tile-aligned row offset

    def kernel(x_ref, eps_ref, w_ref, out_ref):
        x = x_ref[...]
        eps = eps_ref[...]

        # ---- encoder: Linear -> Linear -> ReLU ----
        h = jnp.dot(x, wslice(w_ref, "ew1"),
                    preferred_element_type=f32) + wslice(w_ref, "eb1")
        h = jnp.dot(h, wslice(w_ref, "ew2"),
                    preferred_element_type=f32) + wslice(w_ref, "eb2")
        xwarp = jnp.maximum(h, 0.0)

        # ---- fused zLayer | logVarLayer[0] | muLayer (single MXU push) ----
        fused = jnp.dot(xwarp, wslice(w_ref, "zml_w"),
                        preferred_element_type=f32) + wslice(w_ref, "zml_b")
        zeval = fused[:, :2 * L]                         # zLayer output
        t = fused[:, 2 * L:2 * L + H]                    # logVarLayer first Linear
        mu = jnp.maximum(fused[:, 2 * L + H:2 * L + H + 1], 0.0)  # muLayer+ReLU

        # muZ = sigmoid, then renormalize so it sums to latent_dim.
        # (exp is EUP; plain divide kept for exact match with the reference.)
        muz = 1.0 / (1.0 + jnp.exp(-zeval[:, :L]))
        muz = muz * (f32(L) / jnp.sum(muz))
        logvarz = zeval[:, L:2 * L]

        # ---- remaining logVarLayer: Linear -> Linear(H,1) -> ReLU ----
        t = jnp.dot(t, wslice(w_ref, "lw2"),
                    preferred_element_type=f32) + wslice(w_ref, "lb2")
        logvar = jnp.maximum(
            jnp.dot(t, wslice(w_ref, "lw3"),
                    preferred_element_type=f32) + wslice(w_ref, "lb3"), 0.0)

        # ---- reparameterize on broadcast scalars kMu / kLogVar ----
        kmu = jnp.mean(mu)
        klogvar = jnp.mean(logvar)
        std = jnp.exp(0.5 * klogvar)
        z = (kmu + eps * std) * muz

        # ---- decoder: Linear -> ReLU -> Linear -> Linear ----
        d = jnp.maximum(
            jnp.dot(z, wslice(w_ref, "dw1"),
                    preferred_element_type=f32) + wslice(w_ref, "db1"), 0.0)
        d = jnp.dot(d, wslice(w_ref, "dw2"),
                    preferred_element_type=f32) + wslice(w_ref, "db2")
        xrec = jnp.dot(d, wslice(w_ref, "dw3"),
                       preferred_element_type=f32) + wslice(w_ref, "db3")

        # ---- single packed output slab -> one output DMA ----
        # Each result sits at its own 128-lane-aligned segment.
        out_ref[...] = jnp.zeros_like(out_ref)
        out_ref[:, 0 * LANES:0 * LANES + D] = xrec
        out_ref[:, 1 * LANES:1 * LANES + L] = muz
        out_ref[:, 2 * LANES:2 * LANES + L] = logvarz
        out_ref[:, 3 * LANES:3 * LANES + 1] = mu
        out_ref[:, 4 * LANES:4 * LANES + 1] = logvar
        # TODO(synk): stateful side-effects self.lastMu/lastSigma/lastA0/lastB0
        # are module attributes (not forward outputs) and are not materialized.

    return kernel


# ---------------------------------------------------------------------------
# Wrapper
# ---------------------------------------------------------------------------
@functools.partial(jax.jit,
                   static_argnames=("input_dim", "hidden_dim", "latent_dim"))
def vae_forward(x, eps, wslab, *, input_dim, hidden_dim, latent_dim):
    B = x.shape[0]
    layout, _ = make_layout(input_dim, hidden_dim, latent_dim)
    kernel = make_vae_kernel(layout, input_dim, hidden_dim, latent_dim)

    out_slab = pl.pallas_call(
        kernel,
        out_shape=jax.ShapeDtypeStruct((B, 5 * LANES), jnp.float32),
        compiler_params=pltpu.CompilerParams(vmem_limit_bytes=4 * 1024 * 1024),
    )(x, eps, wslab)

    D, L = input_dim, latent_dim
    xrec    = out_slab[:, 0 * LANES:0 * LANES + D]
    muz     = out_slab[:, 1 * LANES:1 * LANES + L]
    logvarz = out_slab[:, 2 * LANES:2 * LANES + L]
    mu      = out_slab[:, 3 * LANES:3 * LANES + 1]
    logvar  = out_slab[:, 4 * LANES:4 * LANES + 1]
    return xrec, muz, logvarz, mu, logvar


# ---------------------------------------------------------------------------
# Parameter init (weights stored as (in, out)) and pure-JAX reference
# ---------------------------------------------------------------------------
def init_params(key, input_dim, hidden_dim, latent_dim):
    def lin(k, fan_in, fan_out):
        kw, kb = jax.random.split(k)
        bound = 1.0 / jnp.sqrt(fan_in)
        w = jax.random.uniform(kw, (fan_in, fan_out), jnp.float32, -bound, bound)
        b = jax.random.uniform(kb, (1, fan_out), jnp.float32, -bound, bound)
        return w, b

    keys = jax.random.split(key, 11)
    p = {}
    p["ew1"], p["eb1"] = lin(keys[0], input_dim, hidden_dim)
    p["ew2"], p["eb2"] = lin(keys[1], hidden_dim, hidden_dim)
    p["zw"], p["zb"] = lin(keys[2], hidden_dim, 2 * latent_dim)
    p["mw"], p["mb"] = lin(keys[3], hidden_dim, 1)
    p["lw1"], p["lb1"] = lin(keys[4], hidden_dim, hidden_dim)
    p["lw2"], p["lb2"] = lin(keys[5], hidden_dim, hidden_dim)
    p["lw3"], p["lb3"] = lin(keys[6], hidden_dim, 1)
    p["dw1"], p["db1"] = lin(keys[7], latent_dim, hidden_dim)
    p["dw2"], p["db2"] = lin(keys[8], hidden_dim, input_dim)
    p["dw3"], p["db3"] = lin(keys[9], input_dim, input_dim)
    return p


def vae_forward_ref(x, eps, params, latent_dim):
    """Pure-JAX reference replicating the PyTorch forward."""
    p = params
    h = x @ p["ew1"] + p["eb1"]
    h = h @ p["ew2"] + p["eb2"]
    xwarp = jnp.maximum(h, 0.0)
    zeval = xwarp @ p["zw"] + p["zb"]
    muz = jax.nn.sigmoid(zeval[:, :latent_dim])
    muz = (latent_dim / jnp.sum(muz)) * muz
    logvarz = zeval[:, latent_dim:2 * latent_dim]
    mu = jnp.maximum(xwarp @ p["mw"] + p["mb"], 0.0)
    t = xwarp @ p["lw1"] + p["lb1"]
    t = t @ p["lw2"] + p["lb2"]
    logvar = jnp.maximum(t @ p["lw3"] + p["lb3"], 0.0)
    kmu = jnp.ones_like(muz) * jnp.mean(mu)
    klogvar = jnp.ones_like(muz) * jnp.mean(logvar)
    z = (kmu + eps * jnp.exp(0.5 * klogvar)) * muz
    d = jnp.maximum(z @ p["dw1"] + p["db1"], 0.0)
    d = d @ p["dw2"] + p["db2"]
    xrec = d @ p["dw3"] + p["db3"]
    return xrec, muz, logvarz, mu, logvar


if __name__ == "__main__":
    B, INPUT_DIM, HIDDEN_DIM, LATENT_DIM = 8, 16, 32, 8

    key = jax.random.PRNGKey(0)
    k_x, k_eps, k_p = jax.random.split(key, 3)
    x = jax.random.normal(k_x, (B, INPUT_DIM), jnp.float32)
    eps = jax.random.normal(k_eps, (B, LATENT_DIM), jnp.float32)
    params = init_params(k_p, INPUT_DIM, HIDDEN_DIM, LATENT_DIM)

    # Pack the parameter slab once, outside the jitted forward.
    wslab = jax.block_until_ready(
        pack_params(params, INPUT_DIM, HIDDEN_DIM, LATENT_DIM))

    outs = vae_forward(x, eps, wslab, input_dim=INPUT_DIM,
                       hidden_dim=HIDDEN_DIM, latent_dim=LATENT_DIM)
    outs = jax.block_until_ready(outs)

    refs = vae_forward_ref(x, eps, params, LATENT_DIM)
    for o, r in zip(outs, refs):
        assert o.shape == r.shape and o.dtype == r.dtype
        assert jnp.allclose(o, r, rtol=1e-4, atol=1e-4), "mismatch vs reference"

    print("KERNEL_OK")
</pallas_src>

<mosaic_0001>
module attributes {stable_mosaic.version = 11 : i64} {
  func.func @kernel(%arg0: memref<8x16xf32, #tpu.memory_space<vmem>>, %arg1: memref<8x8xf32, #tpu.memory_space<vmem>>, %arg2: memref<264x128xf32, #tpu.memory_space<vmem>>, %arg3: memref<8x640xf32, #tpu.memory_space<vmem>>) attributes {dimension_semantics = [], scalar_prefetch = 0 : i64, scratch_operands = 0 : i64, tpu.core_type = #tpu.core_type<tc>} {
    %c0 = arith.constant 0 : index
    %c0_0 = arith.constant 0 : index
    %0 = vector.load %arg0[%c0, %c0_0] : memref<8x16xf32, #tpu.memory_space<vmem>>, vector<8x16xf32>
    %c0_1 = arith.constant 0 : index
    %c0_2 = arith.constant 0 : index
    %1 = vector.load %arg1[%c0_1, %c0_2] : memref<8x8xf32, #tpu.memory_space<vmem>>, vector<8x8xf32>
    %c0_3 = arith.constant 0 : index
    %c0_4 = arith.constant 0 : index
    %2 = vector.load %arg2[%c0_3, %c0_4] : memref<264x128xf32, #tpu.memory_space<vmem>>, vector<16x32xf32>
    %cst = arith.constant dense<0.000000e+00> : vector<8x32xf32>
    %3 = tpu.matmul %0, %2, %cst {dimension_numbers = #tpu.dot_dimension_numbers<[1], [0], [0], [1], [0, 0, 1, 1], [], []>} : vector<8x16xf32>, vector<16x32xf32>, vector<8x32xf32> -> vector<8x32xf32>
    %c200 = arith.constant 200 : index
    %c0_5 = arith.constant 0 : index
    %4 = vector.load %arg2[%c200, %c0_5] : memref<264x128xf32, #tpu.memory_space<vmem>>, vector<1x32xf32>
    %5 = vector.broadcast %4 : vector<1x32xf32> to vector<8x32xf32>
    %6 = arith.addf %3, %5 : vector<8x32xf32>
    %c16 = arith.constant 16 : index
    %c0_6 = arith.constant 0 : index
    %7 = vector.load %arg2[%c16, %c0_6] : memref<264x128xf32, #tpu.memory_space<vmem>>, vector<32x32xf32>
    %cst_7 = arith.constant dense<0.000000e+00> : vector<8x32xf32>
    %8 = tpu.matmul %6, %7, %cst_7 {dimension_numbers = #tpu.dot_dimension_numbers<[1], [0], [0], [1], [0, 0, 1, 1], [], []>} : vector<8x32xf32>, vector<32x32xf32>, vector<8x32xf32> -> vector<8x32xf32>
    %c208 = arith.constant 208 : index
    %c0_8 = arith.constant 0 : index
    %9 = vector.load %arg2[%c208, %c0_8] : memref<264x128xf32, #tpu.memory_space<vmem>>, vector<1x32xf32>
    %10 = vector.broadcast %9 : vector<1x32xf32> to vector<8x32xf32>
    %11 = arith.addf %8, %10 : vector<8x32xf32>
    %cst_9 = arith.constant 0.000000e+00 : f32
    %12 = vector.broadcast %cst_9 : f32 to vector<8x32xf32>
    %13 = arith.maximumf %11, %12 : vector<8x32xf32>
    %c48 = arith.constant 48 : index
    %c0_10 = arith.constant 0 : index
    %14 = vector.load %arg2[%c48, %c0_10] : memref<264x128xf32, #tpu.memory_space<vmem>>, vector<32x49xf32>
    %cst_11 = arith.constant dense<0.000000e+00> : vector<8x49xf32>
    %15 = tpu.matmul %13, %14, %cst_11 {dimension_numbers = #tpu.dot_dimension_numbers<[1], [0], [0], [1], [0, 0, 1, 1], [], []>} : vector<8x32xf32>, vector<32x49xf32>, vector<8x49xf32> -> vector<8x49xf32>
    %c216 = arith.constant 216 : index
    %c0_12 = arith.constant 0 : index
    %16 = vector.load %arg2[%c216, %c0_12] : memref<264x128xf32, #tpu.memory_space<vmem>>, vector<1x49xf32>
    %17 = vector.broadcast %16 : vector<1x49xf32> to vector<8x49xf32>
    %18 = arith.addf %15, %17 : vector<8x49xf32>
    %19 = vector.extract_strided_slice %18 {offsets = [0, 0], sizes = [8, 16], strides = [1, 1]} : vector<8x49xf32> to vector<8x16xf32>
    %20 = vector.extract_strided_slice %18 {offsets = [0, 16], sizes = [8, 32], strides = [1, 1]} : vector<8x49xf32> to vector<8x32xf32>
    %21 = vector.extract_strided_slice %18 {offsets = [0, 48], sizes = [8, 1], strides = [1, 1]} : vector<8x49xf32> to vector<8x1xf32>
    %cst_13 = arith.constant 0.000000e+00 : f32
    %22 = vector.broadcast %cst_13 : f32 to vector<8x1xf32>
    %23 = arith.maximumf %21, %22 : vector<8x1xf32>
    %24 = vector.extract_strided_slice %19 {offsets = [0, 0], sizes = [8, 8], strides = [1, 1]} : vector<8x16xf32> to vector<8x8xf32>
    %cst_14 = arith.constant 0.000000e+00 : f32
    %25 = vector.broadcast %cst_14 : f32 to vector<8x8xf32>
    %26 = arith.subf %25, %24 : vector<8x8xf32>
    %27 = math.exp %26 : vector<8x8xf32>
    %cst_15 = arith.constant 1.000000e+00 : f32
    %28 = vector.broadcast %cst_15 : f32 to vector<8x8xf32>
    %29 = arith.addf %28, %27 : vector<8x8xf32>
    %cst_16 = arith.constant 1.000000e+00 : f32
    %30 = vector.broadcast %cst_16 : f32 to vector<8x8xf32>
    %31 = arith.divf %30, %29 : vector<8x8xf32>
    %32 = vector.shape_cast %31 : vector<8x8xf32> to vector<1x8x8xf32>
    %cst_17 = arith.constant dense<0.000000e+00> : vector<1xf32>
    %33 = vector.multi_reduction <add>, %32, %cst_17 [1, 2] : vector<1x8x8xf32> to vector<1xf32>
    %34 = vector.shape_cast %33 : vector<1xf32> to vector<1x1x1xf32>
    %35 = vector.extract %34[0, 0, 0] : f32 from vector<1x1x1xf32>
    %cst_18 = arith.constant 8.000000e+00 : f32
    %36 = arith.divf %cst_18, %35 : f32
    %37 = vector.broadcast %36 : f32 to vector<8x8xf32>
    %38 = arith.mulf %31, %37 : vector<8x8xf32>
    %39 = vector.extract_strided_slice %19 {offsets = [0, 8], sizes = [8, 8], strides = [1, 1]} : vector<8x16xf32> to vector<8x8xf32>
    %c80 = arith.constant 80 : index
    %c0_19 = arith.constant 0 : index
    %40 = vector.load %arg2[%c80, %c0_19] : memref<264x128xf32, #tpu.memory_space<vmem>>, vector<32x32xf32>
    %cst_20 = arith.constant dense<0.000000e+00> : vector<8x32xf32>
    %41 = tpu.matmul %20, %40, %cst_20 {dimension_numbers = #tpu.dot_dimension_numbers<[1], [0], [0], [1], [0, 0, 1, 1], [], []>} : vector<8x32xf32>, vector<32x32xf32>, vector<8x32xf32> -> vector<8x32xf32>
    %c224 = arith.constant 224 : index
    %c0_21 = arith.constant 0 : index
    %42 = vector.load %arg2[%c224, %c0_21] : memref<264x128xf32, #tpu.memory_space<vmem>>, vector<1x32xf32>
    %43 = vector.broadcast %42 : vector<1x32xf32> to vector<8x32xf32>
    %44 = arith.addf %41, %43 : vector<8x32xf32>
    %c112 = arith.constant 112 : index
    %c0_22 = arith.constant 0 : index
    %45 = vector.load %arg2[%c112, %c0_22] : memref<264x128xf32, #tpu.memory_space<vmem>>, vector<32x1xf32>
    %cst_23 = arith.constant dense<0.000000e+00> : vector<8x1xf32>
    %46 = tpu.matmul %44, %45, %cst_23 {dimension_numbers = #tpu.dot_dimension_numbers<[1], [0], [0], [1], [0, 0, 1, 1], [], []>} : vector<8x32xf32>, vector<32x1xf32>, vector<8x1xf32> -> vector<8x1xf32>
    %c232 = arith.constant 232 : index
    %c0_24 = arith.constant 0 : index
    %47 = vector.load %arg2[%c232, %c0_24] : memref<264x128xf32, #tpu.memory_space<vmem>>, vector<1x1xf32>
    %48 = vector.broadcast %47 : vector<1x1xf32> to vector<8x1xf32>
    %49 = arith.addf %46, %48 : vector<8x1xf32>
    %cst_25 = arith.constant 0.000000e+00 : f32
    %50 = vector.broadcast %cst_25 : f32 to vector<8x1xf32>
    %51 = arith.maximumf %49, %50 : vector<8x1xf32>
    %52 = vector.shape_cast %23 : vector<8x1xf32> to vector<1x8x1xf32>
    %cst_26 = arith.constant dense<0.000000e+00> : vector<1xf32>
    %53 = vector.multi_reduction <add>, %52, %cst_26 [1, 2] : vector<1x8x1xf32> to vector<1xf32>
    %54 = vector.shape_cast %53 : vector<1xf32> to vector<1x1x1xf32>
    %55 = vector.extract %54[0, 0, 0] : f32 from vector<1x1x1xf32>
    %cst_27 = arith.constant 8.000000e+00 : f32
    %56 = arith.divf %55, %cst_27 : f32
    %57 = vector.shape_cast %51 : vector<8x1xf32> to vector<1x8x1xf32>
    %cst_28 = arith.constant dense<0.000000e+00> : vector<1xf32>
    %58 = vector.multi_reduction <add>, %57, %cst_28 [1, 2] : vector<1x8x1xf32> to vector<1xf32>
    %59 = vector.shape_cast %58 : vector<1xf32> to vector<1x1x1xf32>
    %60 = vector.extract %59[0, 0, 0] : f32 from vector<1x1x1xf32>
    %cst_29 = arith.constant 8.000000e+00 : f32
    %61 = arith.divf %60, %cst_29 : f32
    %cst_30 = arith.constant 5.000000e-01 : f32
    %62 = arith.mulf %cst_30, %61 : f32
    %63 = math.exp %62 : f32
    %64 = vector.broadcast %63 : f32 to vector<8x8xf32>
    %65 = arith.mulf %1, %64 : vector<8x8xf32>
    %66 = vector.broadcast %56 : f32 to vector<8x8xf32>
    %67 = arith.addf %66, %65 : vector<8x8xf32>
    %68 = arith.mulf %67, %38 : vector<8x8xf32>
    %c144 = arith.constant 144 : index
    %c0_31 = arith.constant 0 : index
    %69 = vector.load %arg2[%c144, %c0_31] : memref<264x128xf32, #tpu.memory_space<vmem>>, vector<8x32xf32>
    %cst_32 = arith.constant dense<0.000000e+00> : vector<8x32xf32>
    %70 = tpu.matmul %68, %69, %cst_32 {dimension_numbers = #tpu.dot_dimension_numbers<[1], [0], [0], [1], [0, 0, 1, 1], [], []>} : vector<8x8xf32>, vector<8x32xf32>, vector<8x32xf32> -> vector<8x32xf32>
    %c240 = arith.constant 240 : index
    %c0_33 = arith.constant 0 : index
    %71 = vector.load %arg2[%c240, %c0_33] : memref<264x128xf32, #tpu.memory_space<vmem>>, vector<1x32xf32>
    %72 = vector.broadcast %71 : vector<1x32xf32> to vector<8x32xf32>
    %73 = arith.addf %70, %72 : vector<8x32xf32>
    %cst_34 = arith.constant 0.000000e+00 : f32
    %74 = vector.broadcast %cst_34 : f32 to vector<8x32xf32>
    %75 = arith.maximumf %73, %74 : vector<8x32xf32>
    %c152 = arith.constant 152 : index
    %c0_35 = arith.constant 0 : index
    %76 = vector.load %arg2[%c152, %c0_35] : memref<264x128xf32, #tpu.memory_space<vmem>>, vector<32x16xf32>
    %cst_36 = arith.constant dense<0.000000e+00> : vector<8x16xf32>
    %77 = tpu.matmul %75, %76, %cst_36 {dimension_numbers = #tpu.dot_dimension_numbers<[1], [0], [0], [1], [0, 0, 1, 1], [], []>} : vector<8x32xf32>, vector<32x16xf32>, vector<8x16xf32> -> vector<8x16xf32>
    %c248 = arith.constant 248 : index
    %c0_37 = arith.constant 0 : index
    %78 = vector.load %arg2[%c248, %c0_37] : memref<264x128xf32, #tpu.memory_space<vmem>>, vector<1x16xf32>
    %79 = vector.broadcast %78 : vector<1x16xf32> to vector<8x16xf32>
    %80 = arith.addf %77, %79 : vector<8x16xf32>
    %c184 = arith.constant 184 : index
    %c0_38 = arith.constant 0 : index
    %81 = vector.load %arg2[%c184, %c0_38] : memref<264x128xf32, #tpu.memory_space<vmem>>, vector<16x16xf32>
    %cst_39 = arith.constant dense<0.000000e+00> : vector<8x16xf32>
    %82 = tpu.matmul %80, %81, %cst_39 {dimension_numbers = #tpu.dot_dimension_numbers<[1], [0], [0], [1], [0, 0, 1, 1], [], []>} : vector<8x16xf32>, vector<16x16xf32>, vector<8x16xf32> -> vector<8x16xf32>
    %c256 = arith.constant 256 : index
    %c0_40 = arith.constant 0 : index
    %83 = vector.load %arg2[%c256, %c0_40] : memref<264x128xf32, #tpu.memory_space<vmem>>, vector<1x16xf32>
    %84 = vector.broadcast %83 : vector<1x16xf32> to vector<8x16xf32>
    %85 = arith.addf %82, %84 : vector<8x16xf32>
    %cst_41 = arith.constant 0.000000e+00 : f32
    %86 = vector.broadcast %cst_41 : f32 to vector<8x640xf32>
    %c0_42 = arith.constant 0 : index
    %c0_43 = arith.constant 0 : index
    %87 = vector.load %arg3[%c0_42, %c0_43] : memref<8x640xf32, #tpu.memory_space<vmem>>, vector<8x640xf32>
    tpu.vector_store %arg3[%c0_42, %c0_43], %86 {strides = array<i32>} : memref<8x640xf32, #tpu.memory_space<vmem>>, vector<8x640xf32>,
    %c0_44 = arith.constant 0 : index
    %c0_45 = arith.constant 0 : index
    %88 = vector.load %arg3[%c0_44, %c0_45] : memref<8x640xf32, #tpu.memory_space<vmem>>, vector<8x16xf32>
    tpu.vector_store %arg3[%c0_44, %c0_45], %85 {strides = array<i32>} : memref<8x640xf32, #tpu.memory_space<vmem>>, vector<8x16xf32>,
    %c0_46 = arith.constant 0 : index
    %c128 = arith.constant 128 : index
    %89 = vector.load %arg3[%c0_46, %c128] : memref<8x640xf32, #tpu.memory_space<vmem>>, vector<8x8xf32>
    tpu.vector_store %arg3[%c0_46, %c128], %38 {strides = array<i32>} : memref<8x640xf32, #tpu.memory_space<vmem>>, vector<8x8xf32>,
    %c0_47 = arith.constant 0 : index
    %c256_48 = arith.constant 256 : index
    %90 = vector.load %arg3[%c0_47, %c256_48] : memref<8x640xf32, #tpu.memory_space<vmem>>, vector<8x8xf32>
    tpu.vector_store %arg3[%c0_47, %c256_48], %39 {strides = array<i32>} : memref<8x640xf32, #tpu.memory_space<vmem>>, vector<8x8xf32>,
    %c0_49 = arith.constant 0 : index
    %c384 = arith.constant 384 : index
    %91 = vector.load %arg3[%c0_49, %c384] : memref<8x640xf32, #tpu.memory_space<vmem>>, vector<8x1xf32>
    tpu.vector_store %arg3[%c0_49, %c384], %23 {strides = array<i32>} : memref<8x640xf32, #tpu.memory_space<vmem>>, vector<8x1xf32>,
    %c0_50 = arith.constant 0 : index
    %c512 = arith.constant 512 : index
    %92 = vector.load %arg3[%c0_50, %c512] : memref<8x640xf32, #tpu.memory_space<vmem>>, vector<8x1xf32>
    tpu.vector_store %arg3[%c0_50, %c512], %51 {strides = array<i32>} : memref<8x640xf32, #tpu.memory_space<vmem>>, vector<8x1xf32>,
    return
  }
}

</mosaic_0001>

<llo_original>
// kernel: vae_forward.1
$region0: #{vae_forward.1}
  #allocation0 [shape = 'u32[]', space=smem, size = 0x4, offset = 0x4, fixed_abs, tag = 'smem constant byte address 0x4 - core index']
  #allocation1 [shape = 'u32[144,128]{1,0:T(1,128)}', space=vmem, size = 0x12000, scoped, tag = 'internal scratch']
  %s0 = inlined_call_operand.hbm [shape: f32[8,16], index: 0, kind: input, shape index: {}]
  %s1 = inlined_call_operand.hbm [shape: f32[8,8], index: 1, kind: input, shape index: {}]
  %s2 = inlined_call_operand.hbm [shape: f32[264,128], index: 2, kind: input, shape index: {}]
  %s3 = inlined_call_operand.vmem [shape: f32[8,640], index: 3, kind: output, shape index: {}]
  %s4 = sld [smem:[#allocation0]]
  $region34: #{vae_forward.1} parent=0
    _
  %s6 = ssub.s32 1, %s4
  %s7 = scalar_select 0, %s6, %s4
  $region1: #{vae_forward.1} parent=0
    #allocation2 [shape = 'u8[4096]{0}', space=vmem, size = 0x1000, scoped, tag = 'input window, operand 0, single buffered']
    #allocation3 [shape = 's32[1]{0}', space=sflag, size = 0x4, scoped, tag = 'scoped memory for vae_forward.1']
    #allocation4 [shape = 'u8[4096]{0}', space=vmem, size = 0x1000, scoped, tag = 'input window, operand 1, single buffered']
    #allocation5 [shape = 's32[1]{0}', space=sflag, size = 0x4, scoped, tag = 'scoped memory for vae_forward.1']
    #allocation6 [shape = 'u8[135168]{0}', space=vmem, size = 0x21000, scoped, tag = 'input window, operand 2, single buffered']
    %8 = vsyncpa [#allocation3], 0
    %9 = vsyncpa [#allocation5], 0
    // Predicated region
    $region2: #{vae_forward.1} parent=1 // pred_check
      _
    $region3: #{vae_forward.1} parent=1 // pred_check_branch
      %11 = sbr.rel (0) target = $region5
    $region4: #{vae_forward.1} parent=1 // pred_region
      %s13 = ssub.s32 128, 128
      %14 = vsyncadd [#allocation3], %s13
      %s16 = sshll.u32 [#allocation2], 4
      %s17 = int_to_ptr.vmem [resolvable:$true] %s16
      %19 = dma.hbm_to_vmem [thread:$0]  %s0, 128, %s17, [#allocation3]
    $region5: #{vae_forward.1} parent=1 // pred_fallthru
      _
    // Predicated region
    $region6: #{vae_forward.1} parent=1 // pred_check
      _
    $region7: #{vae_forward.1} parent=1 // pred_check_branch
      %21 = sbr.rel (0) target = $region9
    $region8: #{vae_forward.1} parent=1 // pred_region
      %s23 = ssub.s32 128, 128
      %24 = vsyncadd [#allocation5], %s23
      %s26 = sshll.u32 [#allocation4], 4
      %s27 = int_to_ptr.vmem [resolvable:$true] %s26
      %29 = dma.hbm_to_vmem [thread:$0]  %s1, 128, %s27, [#allocation5]
    $region9: #{vae_forward.1} parent=1 // pred_fallthru
      _
    // Predicated region
    $region10: #{vae_forward.1} parent=1 // pred_check
      _
    $region11: #{vae_forward.1} parent=1 // pred_check_branch
      %31 = sbr.rel (0) target = $region13
    $region12: #{vae_forward.1} parent=1 // pred_region
      %s33 = ssub.s32 4224, 4224
      %34 = vsyncadd [#allocation5], %s33
      %s35 = sshll.u32 [#allocation6], 4
      %s36 = int_to_ptr.vmem [resolvable:$true] %s35
      %41 = dma.hbm_to_vmem [thread:$0]  %s2, 4224, %s36, [#allocation5], 128, 128, 8
    $region13: #{vae_forward.1} parent=1 // pred_fallthru
      _
    // Predicated region
    $region14: #{vae_forward.1} parent=1 // pred_check
      _
    $region15: #{vae_forward.1} parent=1 // pred_check_branch
      %43 = sbr.rel (0) target = $region17
    $region16: #{vae_forward.1} parent=1 // pred_region
      %44 = dma.done [#allocation3], 128
    $region17: #{vae_forward.1} parent=1 // pred_fallthru
      _
    // Predicated region
    $region18: #{vae_forward.1} parent=1 // pred_check
      _
    $region19: #{vae_forward.1} parent=1 // pred_check_branch
      %46 = sbr.rel (0) target = $region21
    $region20: #{vae_forward.1} parent=1 // pred_region
      %47 = dma.done [#allocation5], 128
    $region21: #{vae_forward.1} parent=1 // pred_fallthru
      _
    // Predicated region
    $region22: #{vae_forward.1} parent=1 // pred_check
      _
    $region23: #{vae_forward.1} parent=1 // pred_check_branch
      %49 = sbr.rel (0) target = $region25
    $region24: #{vae_forward.1} parent=1 // pred_region
      %50 = dma.done [#allocation5], 4224
    $region25: #{vae_forward.1} parent=1 // pred_fallthru
      _
    %v51 = vld [vmem:[#allocation2] sm:$0xff]
    %v52 = vld [vmem:[#allocation4] sm:$0xff]
    %v53 = vld [vmem:[#allocation6] sm:$0xff]
    %v54 = vld [vmem:[#allocation6 + $0x8] sm:$0xff]
    %v55 = vld [vmem:[#allocation6 + $0xc8] sm:$0x1]
    %v56 = vlaneseq
    %v57 = vshrl.u32 %v56, 7
    %v58 = vsub.s32 0, %v57
    %v59 = vrot.slane %v55, %v58
    %vm60 = vcmask 130048
    %v62 = vsel %vm60, %v51, 0
    %64 = vmatprep.subr.mxu0 0.0
    %65 = vmatpush1.msra.mxu0 %v53
    %66 = vmatprep.subr.mxu0 0.0
    %67 = vmatpush1.msra.mxu0 %v54
    %68 = vmatprep.subr.mxu0 0.0
    %69 = vmatpush1.msra.mxu0 0.0
    %70 = vmatprep.subr.mxu0 0.0
    %71 = vmatpush1.msra.mxu0 0.0
    %72 = vmatprep.subr.mxu0 0.0
    %73 = vmatpush1.msra.mxu0 0.0
    %74 = vmatprep.subr.mxu0 0.0
    %75 = vmatpush1.msra.mxu0 0.0
    %76 = vmatprep.subr.mxu0 0.0
    %77 = vmatpush1.msra.mxu0 0.0
    %78 = vmatprep.subr.mxu0 0.0
    %79 = vmatpush1.msra.mxu0 0.0
    %80 = vmatprep.subr.mxu0 0.0
    %81 = vmatpush1.msra.mxu0 0.0
    %82 = vmatprep.subr.mxu0 0.0
    %83 = vmatpush1.msra.mxu0 0.0
    %84 = vmatprep.subr.mxu0 0.0
    %85 = vmatpush1.msra.mxu0 0.0
    %86 = vmatprep.subr.mxu0 0.0
    %87 = vmatpush1.msra.mxu0 0.0
    %88 = vmatprep.subr.mxu0 0.0
    %89 = vmatpush1.msra.mxu0 0.0
    %90 = vmatprep.subr.mxu0 0.0
    %91 = vmatpush1.msra.mxu0 0.0
    %92 = vmatprep.subr.mxu0 0.0
    %93 = vmatpush1.msra.mxu0 0.0
    %94 = vmatprep.subr.mxu0 0.0
    %95 = vmatpush1.msra.mxu0 0.0
    %96 = vmatprep.subr.mxu0 0.0
    %97 = vmatpush1.msra.mxu0 0.0
    %98 = vmatprep.subr.mxu0 0.0
    %99 = vmatpush1.msra.mxu0 0.0
    %100 = vmatprep.subr.mxu0 0.0
    %101 = vmatpush1.msra.mxu0 0.0
    %102 = vmatprep.subr.mxu0 0.0
    %103 = vmatpush1.msra.mxu0 0.0
    %104 = vmatprep.subr.mxu0 0.0
    %105 = vmatpush1.msra.mxu0 0.0
    %106 = vmatprep.subr.mxu0 0.0
    %107 = vmatpush1.msra.mxu0 0.0
    %108 = vmatprep.subr.mxu0 0.0
    %109 = vmatpush1.msra.mxu0 0.0
    %110 = vmatprep.subr.mxu0 0.0
    %111 = vmatpush1.msra.mxu0 0.0
    %112 = vmatprep.subr.mxu0 0.0
    %113 = vmatpush1.msra.mxu0 0.0
    %114 = vmatprep.subr.mxu0 0.0
    %115 = vmatpush1.msra.mxu0 0.0
    %116 = vmatprep.subr.mxu0 0.0
    %117 = vmatpush1.msra.mxu0 0.0
    %118 = vmatprep.subr.mxu0 0.0
    %119 = vmatpush1.msra.mxu0 0.0
    %120 = vmatprep.subr.mxu0 0.0
    %121 = vmatpush1.msra.mxu0 0.0
    %122 = vmatprep.subr.mxu0 0.0
    %123 = vmatpush1.msra.mxu0 0.0
    %124 = vmatprep.subr.mxu0 0.0
    %125 = vmatpush1.msra.mxu0 0.0
    %126 = vmatprep.subr.mxu0 0.0
    %127 = vmatpush1.msra.mxu0 0.0
    %128 = vmatprep.mubr.f32.mxu0 0.0
    %129 = vmatmul.mubr.f32.gmra.mrb[0].mxu0 %v62
    %v130 = vpop.f32.mrb[0].mxu0
    %v131 = vadd.f32 %v59, %v130
    %v132 = vpop.f32.mrb[0].mxu0
    %133 = vdwg.mxu0
    %v134 = vld [vmem:[#allocation6 + $0x10] sm:$0xff]
    %v135 = vld [vmem:[#allocation6 + $0x18] sm:$0xff]
    %v136 = vld [vmem:[#allocation6 + $0x20] sm:$0xff]
    %v137 = vld [vmem:[#allocation6 + $0x28] sm:$0xff]
    %v138 = vld [vmem:[#allocation6 + $0xd0] sm:$0x1]
    %v139 = vlaneseq
    %v140 = vshrl.u32 %v139, 7
    %v141 = vsub.s32 0, %v140
    %v142 = vrot.slane %v138, %v141
    %vm143 = vcmask 261120
    %v145 = vsel %vm143, %v131, 0
    %147 = vmatprep.subr.mxu0 0.0
    %148 = vmatpush1.msra.mxu0 %v134
    %149 = vmatprep.subr.mxu0 0.0
    %150 = vmatpush1.msra.mxu0 %v135
    %151 = vmatprep.subr.mxu0 0.0
    %152 = vmatpush1.msra.mxu0 %v136
    %153 = vmatprep.subr.mxu0 0.0
    %154 = vmatpush1.msra.mxu0 %v137
    %155 = vmatprep.subr.mxu0 0.0
    %156 = vmatpush1.msra.mxu0 0.0
    %157 = vmatprep.subr.mxu0 0.0
    %158 = vmatpush1.msra.mxu0 0.0
    %159 = vmatprep.subr.mxu0 0.0
    %160 = vmatpush1.msra.mxu0 0.0
    %161 = vmatprep.subr.mxu0 0.0
    %162 = vmatpush1.msra.mxu0 0.0
    %163 = vmatprep.subr.mxu0 0.0
    %164 = vmatpush1.msra.mxu0 0.0
    %165 = vmatprep.subr.mxu0 0.0
    %166 = vmatpush1.msra.mxu0 0.0
    %167 = vmatprep.subr.mxu0 0.0
    %168 = vmatpush1.msra.mxu0 0.0
    %169 = vmatprep.subr.mxu0 0.0
    %170 = vmatpush1.msra.mxu0 0.0
    %171 = vmatprep.subr.mxu0 0.0
    %172 = vmatpush1.msra.mxu0 0.0
    %173 = vmatprep.subr.mxu0 0.0
    %174 = vmatpush1.msra.mxu0 0.0
    %175 = vmatprep.subr.mxu0 0.0
    %176 = vmatpush1.msra.mxu0 0.0
    %177 = vmatprep.subr.mxu0 0.0
    %178 = vmatpush1.msra.mxu0 0.0
    %179 = vmatprep.subr.mxu0 0.0
    %180 = vmatpush1.msra.mxu0 0.0
    %181 = vmatprep.subr.mxu0 0.0
    %182 = vmatpush1.msra.mxu0 0.0
    %183 = vmatprep.subr.mxu0 0.0
    %184 = vmatpush1.msra.mxu0 0.0
    %185 = vmatprep.subr.mxu0 0.0
    %186 = vmatpush1.msra.mxu0 0.0
    %187 = vmatprep.subr.mxu0 0.0
    %188 = vmatpush1.msra.mxu0 0.0
    %189 = vmatprep.subr.mxu0 0.0
    %190 = vmatpush1.msra.mxu0 0.0
    %191 = vmatprep.subr.mxu0 0.0
    %192 = vmatpush1.msra.mxu0 0.0
    %193 = vmatprep.subr.mxu0 0.0
    %194 = vmatpush1.msra.mxu0 0.0
    %195 = vmatprep.subr.mxu0 0.0
    %196 = vmatpush1.msra.mxu0 0.0
    %197 = vmatprep.subr.mxu0 0.0
    %198 = vmatpush1.msra.mxu0 0.0
    %199 = vmatprep.subr.mxu0 0.0
    %200 = vmatpush1.msra.mxu0 0.0
    %201 = vmatprep.subr.mxu0 0.0
    %202 = vmatpush1.msra.mxu0 0.0
    %203 = vmatprep.subr.mxu0 0.0
    %204 = vmatpush1.msra.mxu0 0.0
    %205 = vmatprep.subr.mxu0 0.0
    %206 = vmatpush1.msra.mxu0 0.0
    %207 = vmatprep.subr.mxu0 0.0
    %208 = vmatpush1.msra.mxu0 0.0
    %209 = vmatprep.subr.mxu0 0.0
    %210 = vmatpush1.msra.mxu0 0.0
    %211 = vmatprep.mubr.f32.mxu0 0.0
    %212 = vmatmul.mubr.f32.gmra.mrb[0].mxu0 %v145
    %v213 = vpop.f32.mrb[0].mxu0
    %v214 = vadd.f32 %v142, %v213
    %v215 = vpop.f32.mrb[0].mxu0
    %216 = vdwg.mxu0
    %v217 = vmax.f32 %v214, 0.0
    %v218 = vld [vmem:[#allocation6 + $0x30] sm:$0xff]
    %v219 = vld [vmem:[#allocation6 + $0x38] sm:$0xff]
    %v220 = vld [vmem:[#allocation6 + $0x40] sm:$0xff]
    %v221 = vld [vmem:[#allocation6 + $0x48] sm:$0xff]
    %v222 = vld [vmem:[#allocation6 + $0xd8] sm:$0x1]
    %v223 = vlaneseq
    %v224 = vshrl.u32 %v223, 7
    %v225 = vsub.s32 0, %v224
    %v226 = vrot.slane %v222, %v225
    %v228 = vsel %vm143, %v217, 0
    %230 = vmatprep.subr.mxu0 0.0
    %231 = vmatpush1.msra.mxu0 %v218
    %232 = vmatprep.subr.mxu0 0.0
    %233 = vmatpush1.msra.mxu0 %v219
    %234 = vmatprep.subr.mxu0 0.0
    %235 = vmatpush1.msra.mxu0 %v220
    %236 = vmatprep.subr.mxu0 0.0
    %237 = vmatpush1.msra.mxu0 %v221
    %238 = vmatprep.subr.mxu0 0.0
    %239 = vmatpush1.msra.mxu0 0.0
    %240 = vmatprep.subr.mxu0 0.0
    %241 = vmatpush1.msra.mxu0 0.0
    %242 = vmatprep.subr.mxu0 0.0
    %243 = vmatpush1.msra.mxu0 0.0
    %244 = vmatprep.subr.mxu0 0.0
    %245 = vmatpush1.msra.mxu0 0.0
    %246 = vmatprep.subr.mxu0 0.0
    %247 = vmatpush1.msra.mxu0 0.0
    %248 = vmatprep.subr.mxu0 0.0
    %249 = vmatpush1.msra.mxu0 0.0
    %250 = vmatprep.subr.mxu0 0.0
    %251 = vmatpush1.msra.mxu0 0.0
    %252 = vmatprep.subr.mxu0 0.0
    %253 = vmatpush1.msra.mxu0 0.0
    %254 = vmatprep.subr.mxu0 0.0
    %255 = vmatpush1.msra.mxu0 0.0
    %256 = vmatprep.subr.mxu0 0.0
    %257 = vmatpush1.msra.mxu0 0.0
    %258 = vmatprep.subr.mxu0 0.0
    %259 = vmatpush1.msra.mxu0 0.0
    %260 = vmatprep.subr.mxu0 0.0
    %261 = vmatpush1.msra.mxu0 0.0
    %262 = vmatprep.subr.mxu0 0.0
    %263 = vmatpush1.msra.mxu0 0.0
    %264 = vmatprep.subr.mxu0 0.0
    %265 = vmatpush1.msra.mxu0 0.0
    %266 = vmatprep.subr.mxu0 0.0
    %267 = vmatpush1.msra.mxu0 0.0
    %268 = vmatprep.subr.mxu0 0.0
    %269 = vmatpush1.msra.mxu0 0.0
    %270 = vmatprep.subr.mxu0 0.0
    %271 = vmatpush1.msra.mxu0 0.0
    %272 = vmatprep.subr.mxu0 0.0
    %273 = vmatpush1.msra.mxu0 0.0
    %274 = vmatprep.subr.mxu0 0.0
    %275 = vmatpush1.msra.mxu0 0.0
    %276 = vmatprep.subr.mxu0 0.0
    %277 = vmatpush1.msra.mxu0 0.0
    %278 = vmatprep.subr.mxu0 0.0
    %279 = vmatpush1.msra.mxu0 0.0
    %280 = vmatprep.subr.mxu0 0.0
    %281 = vmatpush1.msra.mxu0 0.0
    %282 = vmatprep.subr.mxu0 0.0
    %283 = vmatpush1.msra.mxu0 0.0
    %284 = vmatprep.subr.mxu0 0.0
    %285 = vmatpush1.msra.mxu0 0.0
    %286 = vmatprep.subr.mxu0 0.0
    %287 = vmatpush1.msra.mxu0 0.0
    %288 = vmatprep.subr.mxu0 0.0
    %289 = vmatpush1.msra.mxu0 0.0
    %290 = vmatprep.subr.mxu0 0.0
    %291 = vmatpush1.msra.mxu0 0.0
    %292 = vmatprep.subr.mxu0 0.0
    %293 = vmatpush1.msra.mxu0 0.0
    %294 = vmatprep.mubr.f32.mxu0 0.0
    %295 = vmatmul.mubr.f32.gmra.mrb[0].mxu0 %v228
    %v296 = vpop.f32.mrb[0].mxu0
    %v297 = vadd.f32 %v226, %v296
    %v298 = vpop.f32.mrb[0].mxu0
    %299 = vdwg.mxu0
    %v300 = vmax.f32 %v297, 0.0
    %v301 = vsub.f32 0.0, %v297
    %v302 = vmul.f32 %v301, 1.442695
    %v303 = vpow.pop %v302
    %v304 = vadd.f32 %v303, 1.0
    %v305 = vrcp.pop %v304
    %v306 = vmul.f32 1.0, %v305
    %vm307 = vcmask 64512
    %v308 = vsel %vm307, %v306, 0.0
    %309 = vadd.xlane.f32.xlu0 %v308
    %v310 = vpop.xlane.xlu0 %309
    %v311 = vrot.slane %v310, 4
    %v312 = vadd.f32 %v310, %v311
    %v313 = vrot.slane %v312, 2
    %v314 = vadd.f32 %v312, %v313
    %v315 = vrot.slane %v314, 1
    %v316 = vadd.f32 %v314, %v315
    %s317 = vtos %v316
    %v318 = vstv %s317
    %v319 = vrcp.pop %v318
    %s320 = vtos %v319
    %s321 = smul.f32 8.0, %s320
    %v322 = vstv %s321
    %v323 = vmul.f32 %v306, %v322
    %v324 = vld [vmem:[#allocation6 + $0x50] sm:$0xff]
    %v325 = vld [vmem:[#allocation6 + $0x58] sm:$0xff]
    %v326 = vld [vmem:[#allocation6 + $0x60] sm:$0xff]
    %v327 = vld [vmem:[#allocation6 + $0x68] sm:$0xff]
    %v328 = vld [vmem:[#allocation6 + $0xe0] sm:$0x1]
    %v329 = vlaneseq
    %v330 = vshrl.u32 %v329, 7
    %v331 = vsub.s32 0, %v330
    %v332 = vrot.slane %v328, %v331
    %334 = vrot.lane.b32.xlu0 %v297, 112
    %v335 = vpop.permute.xlu0 %334
    %v336 = vsel %vm143, %v335, 0
    %338 = vmatprep.subr.mxu0 0.0
    %339 = vmatpush1.msra.mxu0 %v324
    %340 = vmatprep.subr.mxu0 0.0
    %341 = vmatpush1.msra.mxu0 %v325
    %342 = vmatprep.subr.mxu0 0.0
    %343 = vmatpush1.msra.mxu0 %v326
    %344 = vmatprep.subr.mxu0 0.0
    %345 = vmatpush1.msra.mxu0 %v327
    %346 = vmatprep.subr.mxu0 0.0
    %347 = vmatpush1.msra.mxu0 0.0
    %348 = vmatprep.subr.mxu0 0.0
    %349 = vmatpush1.msra.mxu0 0.0
    %350 = vmatprep.subr.mxu0 0.0
    %351 = vmatpush1.msra.mxu0 0.0
    %352 = vmatprep.subr.mxu0 0.0
    %353 = vmatpush1.msra.mxu0 0.0
    %354 = vmatprep.subr.mxu0 0.0
    %355 = vmatpush1.msra.mxu0 0.0
    %356 = vmatprep.subr.mxu0 0.0
    %357 = vmatpush1.msra.mxu0 0.0
    %358 = vmatprep.subr.mxu0 0.0
    %359 = vmatpush1.msra.mxu0 0.0
    %360 = vmatprep.subr.mxu0 0.0
    %361 = vmatpush1.msra.mxu0 0.0
    %362 = vmatprep.subr.mxu0 0.0
    %363 = vmatpush1.msra.mxu0 0.0
    %364 = vmatprep.subr.mxu0 0.0
    %365 = vmatpush1.msra.mxu0 0.0
    %366 = vmatprep.subr.mxu0 0.0
    %367 = vmatpush1.msra.mxu0 0.0
    %368 = vmatprep.subr.mxu0 0.0
    %369 = vmatpush1.msra.mxu0 0.0
    %370 = vmatprep.subr.mxu0 0.0
    %371 = vmatpush1.msra.mxu0 0.0
    %372 = vmatprep.subr.mxu0 0.0
    %373 = vmatpush1.msra.mxu0 0.0
    %374 = vmatprep.subr.mxu0 0.0
    %375 = vmatpush1.msra.mxu0 0.0
    %376 = vmatprep.subr.mxu0 0.0
    %377 = vmatpush1.msra.mxu0 0.0
    %378 = vmatprep.subr.mxu0 0.0
    %379 = vmatpush1.msra.mxu0 0.0
    %380 = vmatprep.subr.mxu0 0.0
    %381 = vmatpush1.msra.mxu0 0.0
    %382 = vmatprep.subr.mxu0 0.0
    %383 = vmatpush1.msra.mxu0 0.0
    %384 = vmatprep.subr.mxu0 0.0
    %385 = vmatpush1.msra.mxu0 0.0
    %386 = vmatprep.subr.mxu0 0.0
    %387 = vmatpush1.msra.mxu0 0.0
    %388 = vmatprep.subr.mxu0 0.0
    %389 = vmatpush1.msra.mxu0 0.0
    %390 = vmatprep.subr.mxu0 0.0
    %391 = vmatpush1.msra.mxu0 0.0
    %392 = vmatprep.subr.mxu0 0.0
    %393 = vmatpush1.msra.mxu0 0.0
    %394 = vmatprep.subr.mxu0 0.0
    %395 = vmatpush1.msra.mxu0 0.0
    %396 = vmatprep.subr.mxu0 0.0
    %397 = vmatpush1.msra.mxu0 0.0
    %398 = vmatprep.subr.mxu0 0.0
    %399 = vmatpush1.msra.mxu0 0.0
    %400 = vmatprep.subr.mxu0 0.0
    %401 = vmatpush1.msra.mxu0 0.0
    %402 = vmatprep.mubr.f32.mxu0 0.0
    %403 = vmatmul.mubr.f32.gmra.mrb[0].mxu0 %v336
    %v404 = vpop.f32.mrb[0].mxu0
    %v405 = vadd.f32 %v332, %v404
    %v406 = vpop.f32.mrb[0].mxu0
    %407 = vdwg.mxu0
    %v408 = vld [vmem:[#allocation6 + $0x70] sm:$0xff]
    %v409 = vld [vmem:[#allocation6 + $0x78] sm:$0xff]
    %v410 = vld [vmem:[#allocation6 + $0x80] sm:$0xff]
    %v411 = vld [vmem:[#allocation6 + $0x88] sm:$0xff]
    %v412 = vld [vmem:[#allocation6 + $0xe8] sm:$0x1]
    %v413 = vlaneseq
    %v414 = vshrl.u32 %v413, 7
    %v415 = vsub.s32 0, %v414
    %v416 = vrot.slane %v412, %v415
    %v418 = vsel %vm143, %v405, 0
    %420 = vmatprep.subr.mxu0 0.0
    %421 = vmatpush1.msra.mxu0 %v408
    %422 = vmatprep.subr.mxu0 0.0
    %423 = vmatpush1.msra.mxu0 %v409
    %424 = vmatprep.subr.mxu0 0.0
    %425 = vmatpush1.msra.mxu0 %v410
    %426 = vmatprep.subr.mxu0 0.0
    %427 = vmatpush1.msra.mxu0 %v411
    %428 = vmatprep.subr.mxu0 0.0
    %429 = vmatpush1.msra.mxu0 0.0
    %430 = vmatprep.subr.mxu0 0.0
    %431 = vmatpush1.msra.mxu0 0.0
    %432 = vmatprep.subr.mxu0 0.0
    %433 = vmatpush1.msra.mxu0 0.0
    %434 = vmatprep.subr.mxu0 0.0
    %435 = vmatpush1.msra.mxu0 0.0
    %436 = vmatprep.subr.mxu0 0.0
    %437 = vmatpush1.msra.mxu0 0.0
    %438 = vmatprep.subr.mxu0 0.0
    %439 = vmatpush1.msra.mxu0 0.0
    %440 = vmatprep.subr.mxu0 0.0
    %441 = vmatpush1.msra.mxu0 0.0
    %442 = vmatprep.subr.mxu0 0.0
    %443 = vmatpush1.msra.mxu0 0.0
    %444 = vmatprep.subr.mxu0 0.0
    %445 = vmatpush1.msra.mxu0 0.0
    %446 = vmatprep.subr.mxu0 0.0
    %447 = vmatpush1.msra.mxu0 0.0
    %448 = vmatprep.subr.mxu0 0.0
    %449 = vmatpush1.msra.mxu0 0.0
    %450 = vmatprep.subr.mxu0 0.0
    %451 = vmatpush1.msra.mxu0 0.0
    %452 = vmatprep.subr.mxu0 0.0
    %453 = vmatpush1.msra.mxu0 0.0
    %454 = vmatprep.subr.mxu0 0.0
    %455 = vmatpush1.msra.mxu0 0.0
    %456 = vmatprep.subr.mxu0 0.0
    %457 = vmatpush1.msra.mxu0 0.0
    %458 = vmatprep.subr.mxu0 0.0
    %459 = vmatpush1.msra.mxu0 0.0
    %460 = vmatprep.subr.mxu0 0.0
    %461 = vmatpush1.msra.mxu0 0.0
    %462 = vmatprep.subr.mxu0 0.0
    %463 = vmatpush1.msra.mxu0 0.0
    %464 = vmatprep.subr.mxu0 0.0
    %465 = vmatpush1.msra.mxu0 0.0
    %466 = vmatprep.subr.mxu0 0.0
    %467 = vmatpush1.msra.mxu0 0.0
    %468 = vmatprep.subr.mxu0 0.0
    %469 = vmatpush1.msra.mxu0 0.0
    %470 = vmatprep.subr.mxu0 0.0
    %471 = vmatpush1.msra.mxu0 0.0
    %472 = vmatprep.subr.mxu0 0.0
    %473 = vmatpush1.msra.mxu0 0.0
    %474 = vmatprep.subr.mxu0 0.0
    %475 = vmatpush1.msra.mxu0 0.0
    %476 = vmatprep.subr.mxu0 0.0
    %477 = vmatpush1.msra.mxu0 0.0
    %478 = vmatprep.subr.mxu0 0.0
    %479 = vmatpush1.msra.mxu0 0.0
    %480 = vmatprep.subr.mxu0 0.0
    %481 = vmatpush1.msra.mxu0 0.0
    %482 = vmatprep.subr.mxu0 0.0
    %483 = vmatpush1.msra.mxu0 0.0
    %484 = vmatprep.mubr.f32.mxu0 0.0
    %485 = vmatmul.mubr.f32.gmra.mrb[0].mxu0 %v418
    %v486 = vpop.f32.mrb[0].mxu0
    %v487 = vadd.f32 %v416, %v486
    %v488 = vpop.f32.mrb[0].mxu0
    %489 = vdwg.mxu0
    %v490 = vmax.f32 %v487, 0.0
    %492 = vrot.lane.b32.xlu0 %v300, 80
    %v493 = vpop.permute.xlu0 %492
    %vm495 = vcmask 7168
    %v496 = vsel %vm495, %v493, 0.0
    %497 = vadd.xlane.f32.xlu0 %v496
    %v498 = vpop.xlane.xlu0 %497
    %v499 = vrot.slane %v498, 4
    %v500 = vadd.f32 %v498, %v499
    %v501 = vrot.slane %v500, 2
    %v502 = vadd.f32 %v500, %v501
    %v503 = vrot.slane %v502, 1
    %v504 = vadd.f32 %v502, %v503
    %s505 = vtos %v504
    %v506 = vrcp.pop 8.0
    %s507 = vtos %v506
    %s508 = smul.f32 %s505, %s507
    %v509 = vsel %vm495, %v490, 0.0
    %510 = vadd.xlane.f32.xlu0 %v509
    %v511 = vpop.xlane.xlu0 %510
    %v512 = vrot.slane %v511, 4
    %v513 = vadd.f32 %v511, %v512
    %v514 = vrot.slane %v513, 2
    %v515 = vadd.f32 %v513, %v514
    %v516 = vrot.slane %v515, 1
    %v517 = vadd.f32 %v515, %v516
    %s518 = vtos %v517
    %v519 = vrcp.pop 8.0
    %s520 = vtos %v519
    %s521 = smul.f32 %s518, %s520
    %s522 = smul.f32 %s521, 0.5
    %v523 = vstv %s522
    %v524 = vmul.f32 %v523, 1.442695
    %v525 = vpow.pop %v524
    %s526 = vtos %v525
    %v527 = vstv %s526
    %v528 = vmul.f32 %v52, %v527
    %v529 = vstv %s508
    %v530 = vadd.f32 %v529, %v528
    %v531 = vmul.f32 %v530, %v323
    %v532 = vld [vmem:[#allocation6 + $0x90] sm:$0xff]
    %v533 = vld [vmem:[#allocation6 + $0xf0] sm:$0x1]
    %v534 = vlaneseq
    %v535 = vshrl.u32 %v534, 7
    %v536 = vsub.s32 0, %v535
    %v537 = vrot.slane %v533, %v536
    %v539 = vsel %vm307, %v531, 0
    %541 = vmatprep.subr.mxu0 0.0
    %542 = vmatpush1.msra.mxu0 %v532
    %543 = vmatprep.subr.mxu0 0.0
    %544 = vmatpush1.msra.mxu0 0.0
    %545 = vmatprep.subr.mxu0 0.0
    %546 = vmatpush1.msra.mxu0 0.0
    %547 = vmatprep.subr.mxu0 0.0
    %548 = vmatpush1.msra.mxu0 0.0
    %549 = vmatprep.subr.mxu0 0.0
    %550 = vmatpush1.msra.mxu0 0.0
    %551 = vmatprep.subr.mxu0 0.0
    %552 = vmatpush1.msra.mxu0 0.0
    %553 = vmatprep.subr.mxu0 0.0
    %554 = vmatpush1.msra.mxu0 0.0
    %555 = vmatprep.subr.mxu0 0.0
    %556 = vmatpush1.msra.mxu0 0.0
    %557 = vmatprep.subr.mxu0 0.0
    %558 = vmatpush1.msra.mxu0 0.0
    %559 = vmatprep.subr.mxu0 0.0
    %560 = vmatpush1.msra.mxu0 0.0
    %561 = vmatprep.subr.mxu0 0.0
    %562 = vmatpush1.msra.mxu0 0.0
    %563 = vmatprep.subr.mxu0 0.0
    %564 = vmatpush1.msra.mxu0 0.0
    %565 = vmatprep.subr.mxu0 0.0
    %566 = vmatpush1.msra.mxu0 0.0
    %567 = vmatprep.subr.mxu0 0.0
    %568 = vmatpush1.msra.mxu0 0.0
    %569 = vmatprep.subr.mxu0 0.0
    %570 = vmatpush1.msra.mxu0 0.0
    %571 = vmatprep.subr.mxu0 0.0
    %572 = vmatpush1.msra.mxu0 0.0
    %573 = vmatprep.subr.mxu0 0.0
    %574 = vmatpush1.msra.mxu0 0.0
    %575 = vmatprep.subr.mxu0 0.0
    %576 = vmatpush1.msra.mxu0 0.0
    %577 = vmatprep.subr.mxu0 0.0
    %578 = vmatpush1.msra.mxu0 0.0
    %579 = vmatprep.subr.mxu0 0.0
    %580 = vmatpush1.msra.mxu0 0.0
    %581 = vmatprep.subr.mxu0 0.0
    %582 = vmatpush1.msra.mxu0 0.0
    %583 = vmatprep.subr.mxu0 0.0
    %584 = vmatpush1.msra.mxu0 0.0
    %585 = vmatprep.subr.mxu0 0.0
    %586 = vmatpush1.msra.mxu0 0.0
    %587 = vmatprep.subr.mxu0 0.0
    %588 = vmatpush1.msra.mxu0 0.0
    %589 = vmatprep.subr.mxu0 0.0
    %590 = vmatpush1.msra.mxu0 0.0
    %591 = vmatprep.subr.mxu0 0.0
    %592 = vmatpush1.msra.mxu0 0.0
    %593 = vmatprep.subr.mxu0 0.0
    %594 = vmatpush1.msra.mxu0 0.0
    %595 = vmatprep.subr.mxu0 0.0
    %596 = vmatpush1.msra.mxu0 0.0
    %597 = vmatprep.subr.mxu0 0.0
    %598 = vmatpush1.msra.mxu0 0.0
    %599 = vmatprep.subr.mxu0 0.0
    %600 = vmatpush1.msra.mxu0 0.0
    %601 = vmatprep.subr.mxu0 0.0
    %602 = vmatpush1.msra.mxu0 0.0
    %603 = vmatprep.subr.mxu0 0.0
    %604 = vmatpush1.msra.mxu0 0.0
    %605 = vmatprep.mubr.f32.mxu0 0.0
    %606 = vmatmul.mubr.f32.gmra.mrb[0].mxu0 %v539
    %v607 = vpop.f32.mrb[0].mxu0
    %v608 = vadd.f32 %v537, %v607
    %v609 = vpop.f32.mrb[0].mxu0
    %610 = vdwg.mxu0
    %v611 = vmax.f32 %v608, 0.0
    %v612 = vld [vmem:[#allocation6 + $0x98] sm:$0xff]
    %v613 = vld [vmem:[#allocation6 + $0xa0] sm:$0xff]
    %v614 = vld [vmem:[#allocation6 + $0xa8] sm:$0xff]
    %v615 = vld [vmem:[#allocation6 + $0xb0] sm:$0xff]
    %v616 = vld [vmem:[#allocation6 + $0xf8] sm:$0x1]
    %v617 = vlaneseq
    %v618 = vshrl.u32 %v617, 7
    %v619 = vsub.s32 0, %v618
    %v620 = vrot.slane %v616, %v619
    %v622 = vsel %vm143, %v611, 0
    %624 = vmatprep.subr.mxu0 0.0
    %625 = vmatpush1.msra.mxu0 %v612
    %626 = vmatprep.subr.mxu0 0.0
    %627 = vmatpush1.msra.mxu0 %v613
    %628 = vmatprep.subr.mxu0 0.0
    %629 = vmatpush1.msra.mxu0 %v614
    %630 = vmatprep.subr.mxu0 0.0
    %631 = vmatpush1.msra.mxu0 %v615
    %632 = vmatprep.subr.mxu0 0.0
    %633 = vmatpush1.msra.mxu0 0.0
    %634 = vmatprep.subr.mxu0 0.0
    %635 = vmatpush1.msra.mxu0 0.0
    %636 = vmatprep.subr.mxu0 0.0
    %637 = vmatpush1.msra.mxu0 0.0
    %638 = vmatprep.subr.mxu0 0.0
    %639 = vmatpush1.msra.mxu0 0.0
    %640 = vmatprep.subr.mxu0 0.0
    %641 = vmatpush1.msra.mxu0 0.0
    %642 = vmatprep.subr.mxu0 0.0
    %643 = vmatpush1.msra.mxu0 0.0
    %644 = vmatprep.subr.mxu0 0.0
    %645 = vmatpush1.msra.mxu0 0.0
    %646 = vmatprep.subr.mxu0 0.0
    %647 = vmatpush1.msra.mxu0 0.0
    %648 = vmatprep.subr.mxu0 0.0
    %649 = vmatpush1.msra.mxu0 0.0
    %650 = vmatprep.subr.mxu0 0.0
    %651 = vmatpush1.msra.mxu0 0.0
    %652 = vmatprep.subr.mxu0 0.0
    %653 = vmatpush1.msra.mxu0 0.0
    %654 = vmatprep.subr.mxu0 0.0
    %655 = vmatpush1.msra.mxu0 0.0
    %656 = vmatprep.subr.mxu0 0.0
    %657 = vmatpush1.msra.mxu0 0.0
    %658 = vmatprep.subr.mxu0 0.0
    %659 = vmatpush1.msra.mxu0 0.0
    %660 = vmatprep.subr.mxu0 0.0
    %661 = vmatpush1.msra.mxu0 0.0
    %662 = vmatprep.subr.mxu0 0.0
    %663 = vmatpush1.msra.mxu0 0.0
    %664 = vmatprep.subr.mxu0 0.0
    %665 = vmatpush1.msra.mxu0 0.0
    %666 = vmatprep.subr.mxu0 0.0
    %667 = vmatpush1.msra.mxu0 0.0
    %668 = vmatprep.subr.mxu0 0.0
    %669 = vmatpush1.msra.mxu0 0.0
    %670 = vmatprep.subr.mxu0 0.0
    %671 = vmatpush1.msra.mxu0 0.0
    %672 = vmatprep.subr.mxu0 0.0
    %673 = vmatpush1.msra.mxu0 0.0
    %674 = vmatprep.subr.mxu0 0.0
    %675 = vmatpush1.msra.mxu0 0.0
    %676 = vmatprep.subr.mxu0 0.0
    %677 = vmatpush1.msra.mxu0 0.0
    %678 = vmatprep.subr.mxu0 0.0
    %679 = vmatpush1.msra.mxu0 0.0
    %680 = vmatprep.subr.mxu0 0.0
    %681 = vmatpush1.msra.mxu0 0.0
    %682 = vmatprep.subr.mxu0 0.0
    %683 = vmatpush1.msra.mxu0 0.0
    %684 = vmatprep.subr.mxu0 0.0
    %685 = vmatpush1.msra.mxu0 0.0
    %686 = vmatprep.subr.mxu0 0.0
    %687 = vmatpush1.msra.mxu0 0.0
    %688 = vmatprep.mubr.f32.mxu0 0.0
    %689 = vmatmul.mubr.f32.gmra.mrb[0].mxu0 %v622
    %v690 = vpop.f32.mrb[0].mxu0
    %v691 = vadd.f32 %v620, %v690
    %v692 = vpop.f32.mrb[0].mxu0
    %693 = vdwg.mxu0
    %v694 = vld [vmem:[#allocation6 + $0xb8] sm:$0xff]
    %v695 = vld [vmem:[#allocation6 + $0xc0] sm:$0xff]
    %v696 = vld [vmem:[#allocation6 + $0x100] sm:$0x1]
    %v697 = vlaneseq
    %v698 = vshrl.u32 %v697, 7
    %v699 = vsub.s32 0, %v698
    %v700 = vrot.slane %v696, %v699
    %v702 = vsel %vm60, %v691, 0
    %704 = vmatprep.subr.mxu0 0.0
    %705 = vmatpush1.msra.mxu0 %v694
    %706 = vmatprep.subr.mxu0 0.0
    %707 = vmatpush1.msra.mxu0 %v695
    %708 = vmatprep.subr.mxu0 0.0
    %709 = vmatpush1.msra.mxu0 0.0
    %710 = vmatprep.subr.mxu0 0.0
    %711 = vmatpush1.msra.mxu0 0.0
    %712 = vmatprep.subr.mxu0 0.0
    %713 = vmatpush1.msra.mxu0 0.0
    %714 = vmatprep.subr.mxu0 0.0
    %715 = vmatpush1.msra.mxu0 0.0
    %716 = vmatprep.subr.mxu0 0.0
    %717 = vmatpush1.msra.mxu0 0.0
    %718 = vmatprep.subr.mxu0 0.0
    %719 = vmatpush1.msra.mxu0 0.0
    %720 = vmatprep.subr.mxu0 0.0
    %721 = vmatpush1.msra.mxu0 0.0
    %722 = vmatprep.subr.mxu0 0.0
    %723 = vmatpush1.msra.mxu0 0.0
    %724 = vmatprep.subr.mxu0 0.0
    %725 = vmatpush1.msra.mxu0 0.0
    %726 = vmatprep.subr.mxu0 0.0
    %727 = vmatpush1.msra.mxu0 0.0
    %728 = vmatprep.subr.mxu0 0.0
    %729 = vmatpush1.msra.mxu0 0.0
    %730 = vmatprep.subr.mxu0 0.0
    %731 = vmatpush1.msra.mxu0 0.0
    %732 = vmatprep.subr.mxu0 0.0
    %733 = vmatpush1.msra.mxu0 0.0
    %734 = vmatprep.subr.mxu0 0.0
    %735 = vmatpush1.msra.mxu0 0.0
    %736 = vmatprep.subr.mxu0 0.0
    %737 = vmatpush1.msra.mxu0 0.0
    %738 = vmatprep.subr.mxu0 0.0
    %739 = vmatpush1.msra.mxu0 0.0
    %740 = vmatprep.subr.mxu0 0.0
    %741 = vmatpush1.msra.mxu0 0.0
    %742 = vmatprep.subr.mxu0 0.0
    %743 = vmatpush1.msra.mxu0 0.0
    %744 = vmatprep.subr.mxu0 0.0
    %745 = vmatpush1.msra.mxu0 0.0
    %746 = vmatprep.subr.mxu0 0.0
    %747 = vmatpush1.msra.mxu0 0.0
    %748 = vmatprep.subr.mxu0 0.0
    %749 = vmatpush1.msra.mxu0 0.0
    %750 = vmatprep.subr.mxu0 0.0
    %751 = vmatpush1.msra.mxu0 0.0
    %752 = vmatprep.subr.mxu0 0.0
    %753 = vmatpush1.msra.mxu0 0.0
    %754 = vmatprep.subr.mxu0 0.0
    %755 = vmatpush1.msra.mxu0 0.0
    %756 = vmatprep.subr.mxu0 0.0
    %757 = vmatpush1.msra.mxu0 0.0
    %758 = vmatprep.subr.mxu0 0.0
    %759 = vmatpush1.msra.mxu0 0.0
    %760 = vmatprep.subr.mxu0 0.0
    %761 = vmatpush1.msra.mxu0 0.0
    %762 = vmatprep.subr.mxu0 0.0
    %763 = vmatpush1.msra.mxu0 0.0
    %764 = vmatprep.subr.mxu0 0.0
    %765 = vmatpush1.msra.mxu0 0.0
    %766 = vmatprep.subr.mxu0 0.0
    %767 = vmatpush1.msra.mxu0 0.0
    %768 = vmatprep.mubr.f32.mxu0 0.0
    %769 = vmatmul.mubr.f32.gmra.mrb[0].mxu0 %v702
    %v770 = vpop.f32.mrb[0].mxu0
    %v771 = vadd.f32 %v700, %v770
    %v772 = vpop.f32.mrb[0].mxu0
    %773 = vdwg.mxu0
    %774 = vst [vmem:[%s3] sm:$0xff] 0.0
    %775 = vst [vmem:[%s3 + $0x8] sm:$0xff] 0.0
    %776 = vst [vmem:[%s3 + $0x10] sm:$0xff] 0.0
    %777 = vst [vmem:[%s3 + $0x18] sm:$0xff] 0.0
    %778 = vst [vmem:[%s3 + $0x20] sm:$0xff] 0.0
    %779 = vst.msk [vmem:[%s3] sm:$0xff] %vm60, %v771
    %780 = vst.msk [vmem:[%s3 + $0x8] sm:$0xff] %vm307, %v323
    %781 = vrot.lane.b32.xlu0 %v297, 120
    %v782 = vpop.permute.xlu0 %781
    %784 = vst.msk [vmem:[%s3 + $0x10] sm:$0xff] %vm307, %v782
    %785 = vst.msk [vmem:[%s3 + $0x18] sm:$0xff] %vm495, %v493
    %786 = vst.msk [vmem:[%s3 + $0x20] sm:$0xff] %vm495, %v490
    // Predicated region
    $region26: #{vae_forward.1} parent=1 // pred_check
      _
    $region27: #{vae_forward.1} parent=1 // pred_check_branch
      %788 = sbr.rel (0) target = $region29
    $region28: #{vae_forward.1} parent=1 // pred_region
      _
    $region29: #{vae_forward.1} parent=1 // pred_fallthru
      _
    // Predicated region
    $region30: #{vae_forward.1} parent=1 // pred_check
      _
    $region31: #{vae_forward.1} parent=1 // pred_check_branch
      %790 = sbr.rel (0) target = $region33
    $region32: #{vae_forward.1} parent=1 // pred_region
      _
    $region33: #{vae_forward.1} parent=1 // pred_fallthru
      _
    %791 = vsyncpa [#allocation3], 1
    %792 = vsyncpa [#allocation5], 1

</llo_original>
